<compile_context>
chip_gen: v7x
topology: tpu7x:2x2x1
jax: 0.10.0
libtpu: 0.0.40
codegen_flags: <defaults>
</compile_context>

<pallas_src>
import jax
import jax.numpy as jnp
from jax.experimental import pallas as pl
from jax.experimental.pallas import tpu as pltpu

N = 2                 # state dimension n == d_h_in (traj_input=False)
H = 32                # layer_width
CP1 = N // 2          # channel_part_1 == 1
CP2 = N - CP1         # channel_part_2 == 1
H2 = 2 * H            # xt-pass rows | x_zero-pass rows
H4 = 4 * H


def _round_up(v, m):
    return ((v + m - 1) // m) * m


# --------------------------------------------------------------------------
# Kernel (batch on lanes)
# --------------------------------------------------------------------------
def _coupling_kernel(x_ref, cols_ref, w_big_ref, w3_ref, wc_ref, mct_ref,
                     y_ref):
    # x block: (6, TB).  rows: xt0 xt1 xtdot0 xtdot1 xzero0 xzero1
    x = x_ref[...]
    cols = cols_ref[...]          # (2H, 8)  per-feature column vectors
    w_big = w_big_ref[...]        # (4H, 2H) blockdiag [Wh1,Wh1 | Wh2,Wh2]
    w3 = w3_ref[...]              # (4H+8, 4H) blockdiag Wh2 x4 + fc_out rows
    wc = wc_ref[...]              # (8, 2H)  fc_out rows for the gradient path
    mct = mct_ref[...]            # (4, 8)   folded NLa/NLc coefficients (mc^T)

    u = x[0:1, :]                 # xt[:, 0]      (s/t-net input, xt pass)
    v = x[4:5, :]                 # x_zero[:, 0]  (x_zero pass)

    # fc_in folded into fc_hidden1:
    #   h1 = relu(W_h1 (W_in x + b_in) + b_h1) = relu(g0 * x + c1)
    # xt pass in rows [0, H), x_zero pass in rows [H, 2H).
    h1 = jnp.maximum(cols[:, 0:1] * u + cols[:, 1:2] * v + cols[:, 2:3], 0.0)

    # --- matmul A: delta1 pre-act (rows 0:2H) and h2 pre-act (rows 2H:4H) ---
    z = jnp.dot(w_big, h1, preferred_element_type=jnp.float32)     # (4H, TB)
    d1 = z[0:H2] > cols[:, 3:4]                    # sign(relu(z + b_h1))
    h2 = jnp.maximum(z[H2:H4] + cols[:, 5:6], 0.0)
    g = jnp.where(d1, cols[:, 4:5], 0.0)           # delta1 * (W_h1 @ W_in)

    # --- matmul B: W_h2 on [h2 | g] + fc_out(h2) rows (8-aligned concat) ----
    hg = jnp.concatenate([h2, g], axis=0)           # (4H, TB)
    zz = jnp.dot(w3, hg, preferred_element_type=jnp.float32)       # (4H+8, TB)
    g_fin = jnp.where(zz[0:H2] > cols[:, 6:7], zz[H2:H4], 0.0)     # delta2*(Wh2 g)
    s_out = zz[H4:H4 + 2] + cols[0:2, 7:8]          # fc_out: [xt pass; xz pass]

    # --- matmul C: s_grad = W_out @ g_fin for both passes -------------------
    sc = jnp.dot(wc, g_fin, preferred_element_type=jnp.float32)    # (8, TB)

    es = jnp.exp(s_out)                             # (2, TB) on the EUP
    es_t, es_z = es[0:1], es[1:2]
    so_t = s_out[0:1]
    sg_t, sg_z = sc[0:1], sc[1:2]
    xt1, xz1 = x[1:2, :], x[5:6, :]

    et = es_t * xt1
    h1c = et + so_t                                 # h_out[:, 1]  (t_out == s_out)
    j3_t = sg_t * (et + 1.0)                        # jacobian3 (xt pass)
    j4_t = es_t                                     # jacobian4 (xt pass)
    ez = es_z * xz1
    j3_z = sg_z * (ez + 1.0)
    j4_z = es_z

    # --- folded NLa1/NLa2/NLa3 + NLc chain (lane-dense VPU FMAs) ------------
    h0 = u
    h0sq = h0 * h0
    h1sq = h1c * h1c
    monos = (h0, h1c, h0sq, h1sq, h0 * h1c, h0sq * h0, h0 * h1sq, h0sq * h1c)
    c_out = mct[:, 0:1] * monos[0]                  # (4, TB)
    for k in range(1, 8):
        c_out = c_out + mct[:, k:k + 1] * monos[k]

    # --- lane-dense output row stores ---------------------------------------
    y_ref[0:1, :] = x[0:1, :]                       # h_out[:, 0] == xt[:, 0]
    y_ref[1:2, :] = h1c                             # h_out[:, 1]
    y_ref[2:3, :] = x[2:3, :]                       # h_dot[:, 0]
    y_ref[3:4, :] = j3_t * x[2:3, :] + j4_t * x[3:4, :]   # h_dot[:, 1]
    y_ref[4:5, :] = jnp.ones_like(h1c)              # ||h_zerograd|| row 0
    y_ref[5:6, :] = jnp.sqrt(j3_z * j3_z + j4_z * j4_z)
    y_ref[6:10, :] = c_out - x[0:4, :]  # TODO(synk): reference c_out - x shape bug


# --------------------------------------------------------------------------
# Host-side parameter folding (all batch-independent algebra done here)
# --------------------------------------------------------------------------
def pack_kernel_params(w_in, b_in, w_h1, b_h1, w_h2, b_h2, w_out, b_out,
                       a1_w, a2_w, a3_w, ac_w):
    f32 = jnp.float32
    (w_in, b_in, w_h1, b_h1, w_h2, b_h2, w_out, b_out,
     a1_w, a2_w, a3_w, ac_w) = (jnp.asarray(a, f32) for a in
                                (w_in, b_in, w_h1, b_h1, w_h2, b_h2, w_out,
                                 b_out, a1_w, a2_w, a3_w, ac_w))

    g0 = (w_h1 @ w_in).reshape(H)            # W_h1 @ W_in (fc_in fold + grad seed)
    c1 = w_h1 @ b_in + b_h1                  # W_h1 @ b_in + b_h1
    zh = jnp.zeros((H,), f32)
    col7 = jnp.zeros((H2,), f32).at[0:2].set(b_out[0])
    cols = jnp.stack([
        jnp.concatenate([g0, zh]),           # 0: g0 (xt-pass rows)
        jnp.concatenate([zh, g0]),           # 1: g0 (x_zero-pass rows)
        jnp.concatenate([c1, c1]),           # 2: c1
        jnp.concatenate([-b_h1, -b_h1]),     # 3: -b_h1 (delta1 threshold)
        jnp.concatenate([g0, g0]),           # 4: g0 (gradient seed)
        jnp.concatenate([b_h2, b_h2]),       # 5: b_h2
        jnp.concatenate([-b_h2, -b_h2]),     # 6: -b_h2 (delta2 threshold)
        col7,                                # 7: b_out in rows 0/1
    ], axis=1)                               # (2H, 8)

    # matmul A LHS: blockdiag(W_h1, W_h1) stacked over blockdiag(W_h2, W_h2)
    w_big = jnp.zeros((H4, H2), f32)
    w_big = w_big.at[0:H, 0:H].set(w_h1)
    w_big = w_big.at[H:H2, H:H2].set(w_h1)
    w_big = w_big.at[H2:3 * H, 0:H].set(w_h2)
    w_big = w_big.at[3 * H:H4, H:H2].set(w_h2)

    # matmul B LHS: 4x blockdiag W_h2 (+ fc_out rows), acting on [h2 | g]
    w3 = jnp.zeros((H4 + 8, H4), f32)
    w3 = w3.at[0:H, 0:H].set(w_h2)
    w3 = w3.at[H:H2, H:H2].set(w_h2)
    w3 = w3.at[H2:3 * H, H2:3 * H].set(w_h2)
    w3 = w3.at[3 * H:H4, 3 * H:H4].set(w_h2)
    w3 = w3.at[H4, 0:H].set(w_out[0])
    w3 = w3.at[H4 + 1, H:H2].set(w_out[0])

    # matmul C LHS: fc_out applied per pass to the gradient path
    wc = jnp.zeros((8, H2), f32)
    wc = wc.at[0, 0:H].set(w_out[0])
    wc = wc.at[1, H:H2].set(w_out[0])

    # Fold NLa1/NLa2/NLa3 + NLc: c1 = yp @ blk^T @ ac^T, c2 = yp @ ac^T
    blk = jnp.zeros((9, 9), f32)
    blk = blk.at[0:2, 0:2].set(a1_w)
    blk = blk.at[2:5, 2:5].set(a2_w)
    blk = blk.at[5:9, 5:9].set(a3_w)
    m1 = blk.T @ ac_w.T                                   # (9, 2)
    mc9 = jnp.concatenate([m1, ac_w.T], axis=1)           # (9, 4)
    # fold the duplicated h0^3 columns of yp3 into one row
    mc = jnp.concatenate([mc9[:5], mc9[5:6] + mc9[6:7], mc9[7:]], axis=0)
    mct = mc.T                                            # (4, 8)

    return (cols, w_big, w3, wc, mct)


# --------------------------------------------------------------------------
# Wrapper
# --------------------------------------------------------------------------
def coupling_forward(x, kernel_params, a1_weight, *, tb=2048):
    """Returns [y_pred (B, 5n), a1 (B, n, n)] like the PyTorch forward."""
    B = x.shape[0]
    x = jnp.asarray(x, jnp.float32)

    lanes = _round_up(B, 128)                  # batch padded to whole lanes
    nsteps = max(-(-lanes // tb), 1)
    if nsteps == 1 and lanes >= 256:
        nsteps = 2                             # >=2 grid steps: v7x has 2 TCs
    TB = _round_up(-(-lanes // nsteps), 128)
    B_pad = TB * nsteps

    x_t = jnp.pad(x, ((0, B_pad - B), (0, 0))).T           # (6, B_pad) batch->lanes

    param_specs = [pl.BlockSpec(p.shape, lambda i: (0, 0)) for p in kernel_params]
    y_t = pl.pallas_call(
        _coupling_kernel,
        out_shape=jax.ShapeDtypeStruct((5 * N, B_pad), jnp.float32),
        grid=(nsteps,),
        in_specs=[pl.BlockSpec((3 * N, TB), lambda i: (0, i))] + param_specs,
        out_specs=pl.BlockSpec((5 * N, TB), lambda i: (0, i)),
        compiler_params=pltpu.CompilerParams(
            dimension_semantics=("parallel",),
            vmem_limit_bytes=32 * 1024 * 1024),
    )(x_t, *kernel_params)

    y_pred = y_t[:, :B].T                                   # (B, 10)
    a1 = jnp.broadcast_to(jnp.asarray(a1_weight, jnp.float32)[None, :, :],
                          (B, N, N))
    return y_pred, a1


# --------------------------------------------------------------------------
# Pure-JAX reference (naive, mirrors the PyTorch code) for the sanity check
# --------------------------------------------------------------------------
def _reference_forward(x, w_in, b_in, w_h1, b_h1, w_h2, b_h2, w_out, b_out,
                       a1_w, a2_w, a3_w, ac_w):
    relu = lambda v: jnp.maximum(v, 0.0)

    def diff_jaco(x1):
        h0 = x1 @ w_in.T + b_in
        h1 = relu(h0 @ w_h1.T + b_h1)
        h2 = relu(h1 @ w_h2.T + b_h2)
        h_out = h2 @ w_out.T + b_out
        hg = (w_h1 @ w_in).T                        # (1, H)
        delta1 = jnp.sign(relu(h1 @ w_h1.T + b_h1))
        g = delta1 * hg
        delta2 = jnp.sign(relu(h2 @ w_h2.T + b_h2))
        g = delta2 * (g @ w_h2.T)
        grad = g @ w_out.T
        return grad, h_out

    def calcu_h(xp):
        x1, x2 = xp[:, 0:1], xp[:, 1:2]
        sg, so = diff_jaco(x1)
        es = jnp.exp(so)
        y2 = es * x2 + so
        out = jnp.concatenate([x1, y2], 1)
        j3 = sg * es * x2 + sg
        return out, j3, es

    xt, xtd, xz = x[:, 0:2], x[:, 2:4], x[:, 4:6]
    hout, j3, j4 = calcu_h(xt)
    hdot = jnp.concatenate([xtd[:, 0:1], j3 * xtd[:, 0:1] + j4 * xtd[:, 1:2]], 1)
    _, zj3, zj4 = calcu_h(xz)
    znorm = jnp.concatenate([jnp.ones_like(zj3), jnp.sqrt(zj3 ** 2 + zj4 ** 2)], 1)
    h0, h1 = hout[:, 0:1], hout[:, 1:2]
    yp1 = hout
    yp2 = jnp.concatenate([h0 ** 2, h1 ** 2, h0 * h1], 1)
    yp3 = jnp.concatenate([h0 ** 3, h0 ** 3, h0 * h1 ** 2, h0 ** 2 * h1], 1)
    a1o, a2o, a3o = yp1 @ a1_w.T, yp2 @ a2_w.T, yp3 @ a3_w.T
    c1 = jnp.concatenate([a1o, a2o, a3o], 1) @ ac_w.T
    c2 = jnp.concatenate([yp1, yp2, yp3], 1) @ ac_w.T
    c_out = jnp.concatenate([c1, c2], 1)
    c_out_dot = c_out - x[:, 0:4]
    return jnp.concatenate([hout, hdot, znorm, c_out_dot], 1)


def _init_linear(key, out_dim, in_dim, bias=True):
    bound = 1.0 / (in_dim ** 0.5)
    kw, kb = jax.random.split(key)
    w = jax.random.uniform(kw, (out_dim, in_dim), jnp.float32, -bound, bound)
    b = jax.random.uniform(kb, (out_dim,), jnp.float32, -bound, bound) if bias else None
    return w, b


if __name__ == "__main__":
    B = 8
    key = jax.random.PRNGKey(0)
    ks = jax.random.split(key, 10)

    w_in, b_in = _init_linear(ks[0], H, CP1)          # fc_in
    w_h1, b_h1 = _init_linear(ks[1], H, H)            # fc_hidden1
    w_h2, b_h2 = _init_linear(ks[2], H, H)            # fc_hidden2
    w_out, b_out = _init_linear(ks[3], CP2, H)        # fc_out
    a1_w, _ = _init_linear(ks[4], N, N, bias=False)   # NLa1_out
    a2_w, _ = _init_linear(ks[5], 3, 3, bias=False)   # NLa2_out
    a3_w, _ = _init_linear(ks[6], 4, 4, bias=False)   # NLa3_out
    ac_w, _ = _init_linear(ks[7], N, 9, bias=False)   # NLc_out

    kernel_params = pack_kernel_params(w_in, b_in, w_h1, b_h1, w_h2, b_h2,
                                       w_out, b_out, a1_w, a2_w, a3_w, ac_w)

    x = jax.random.normal(ks[8], (B, 3 * N), jnp.float32)

    y_pred, a1 = coupling_forward(x, kernel_params, a1_w)
    jax.block_until_ready((y_pred, a1))

    y_ref = _reference_forward(x, w_in, b_in, w_h1, b_h1, w_h2, b_h2,
                               w_out, b_out, a1_w, a2_w, a3_w, ac_w)

    assert y_pred.shape == (B, 5 * N)
    assert a1.shape == (B, N, N)
    assert jnp.allclose(y_pred, y_ref, atol=1e-3, rtol=1e-3)

    print("KERNEL_OK")
</pallas_src>

<mosaic_0001>
module attributes {stable_mosaic.version = 11 : i64} {
  func.func @_coupling_kernel(%arg0: i32, %arg1: memref<6x128xf32, #tpu.memory_space<vmem>>, %arg2: memref<64x8xf32, #tpu.memory_space<vmem>>, %arg3: memref<128x64xf32, #tpu.memory_space<vmem>>, %arg4: memref<136x128xf32, #tpu.memory_space<vmem>>, %arg5: memref<8x64xf32, #tpu.memory_space<vmem>>, %arg6: memref<4x8xf32, #tpu.memory_space<vmem>>, %arg7: memref<10x128xf32, #tpu.memory_space<vmem>>) attributes {dimension_semantics = [#tpu.dimension_semantics<parallel>], iteration_bounds = array<i64: 1>, scalar_prefetch = 0 : i64, scratch_operands = 0 : i64, tpu.core_type = #tpu.core_type<tc>, window_params = [{transform_indices = @transform_0, window_bounds = array<i64: 6, 128>}, {pipeline_mode = #tpu.pipeline_mode<synchronous>, transform_indices = @transform_1, window_bounds = array<i64: 64, 8>}, {pipeline_mode = #tpu.pipeline_mode<synchronous>, transform_indices = @transform_2, window_bounds = array<i64: 128, 64>}, {pipeline_mode = #tpu.pipeline_mode<synchronous>, transform_indices = @transform_3, window_bounds = array<i64: 136, 128>}, {pipeline_mode = #tpu.pipeline_mode<synchronous>, transform_indices = @transform_4, window_bounds = array<i64: 8, 64>}, {pipeline_mode = #tpu.pipeline_mode<synchronous>, transform_indices = @transform_5, window_bounds = array<i64: 4, 8>}, {transform_indices = @transform_6, window_bounds = array<i64: 10, 128>}]} {
    %c0 = arith.constant 0 : index
    %c0_0 = arith.constant 0 : index
    %0 = vector.load %arg1[%c0, %c0_0] : memref<6x128xf32, #tpu.memory_space<vmem>>, vector<6x128xf32>
    %c0_1 = arith.constant 0 : index
    %c0_2 = arith.constant 0 : index
    %1 = vector.load %arg2[%c0_1, %c0_2] : memref<64x8xf32, #tpu.memory_space<vmem>>, vector<64x8xf32>
    %c0_3 = arith.constant 0 : index
    %c0_4 = arith.constant 0 : index
    %2 = vector.load %arg3[%c0_3, %c0_4] : memref<128x64xf32, #tpu.memory_space<vmem>>, vector<128x64xf32>
    %c0_5 = arith.constant 0 : index
    %c0_6 = arith.constant 0 : index
    %3 = vector.load %arg4[%c0_5, %c0_6] : memref<136x128xf32, #tpu.memory_space<vmem>>, vector<136x128xf32>
    %c0_7 = arith.constant 0 : index
    %c0_8 = arith.constant 0 : index
    %4 = vector.load %arg5[%c0_7, %c0_8] : memref<8x64xf32, #tpu.memory_space<vmem>>, vector<8x64xf32>
    %c0_9 = arith.constant 0 : index
    %c0_10 = arith.constant 0 : index
    %5 = vector.load %arg6[%c0_9, %c0_10] : memref<4x8xf32, #tpu.memory_space<vmem>>, vector<4x8xf32>
    %6 = vector.extract_strided_slice %0 {offsets = [0, 0], sizes = [1, 128], strides = [1, 1]} : vector<6x128xf32> to vector<1x128xf32>
    %7 = vector.extract_strided_slice %0 {offsets = [4, 0], sizes = [1, 128], strides = [1, 1]} : vector<6x128xf32> to vector<1x128xf32>
    %8 = vector.extract_strided_slice %1 {offsets = [0, 0], sizes = [64, 1], strides = [1, 1]} : vector<64x8xf32> to vector<64x1xf32>
    %9 = vector.broadcast %8 : vector<64x1xf32> to vector<64x128xf32>
    %10 = vector.broadcast %6 : vector<1x128xf32> to vector<64x128xf32>
    %11 = arith.mulf %9, %10 : vector<64x128xf32>
    %12 = vector.extract_strided_slice %1 {offsets = [0, 1], sizes = [64, 1], strides = [1, 1]} : vector<64x8xf32> to vector<64x1xf32>
    %13 = vector.broadcast %12 : vector<64x1xf32> to vector<64x128xf32>
    %14 = vector.broadcast %7 : vector<1x128xf32> to vector<64x128xf32>
    %15 = arith.mulf %13, %14 : vector<64x128xf32>
    %16 = arith.addf %11, %15 : vector<64x128xf32>
    %17 = vector.extract_strided_slice %1 {offsets = [0, 2], sizes = [64, 1], strides = [1, 1]} : vector<64x8xf32> to vector<64x1xf32>
    %18 = vector.broadcast %17 : vector<64x1xf32> to vector<64x128xf32>
    %19 = arith.addf %16, %18 : vector<64x128xf32>
    %cst = arith.constant 0.000000e+00 : f32
    %20 = vector.broadcast %cst : f32 to vector<64x128xf32>
    %21 = arith.maximumf %19, %20 : vector<64x128xf32>
    %cst_11 = arith.constant dense<0.000000e+00> : vector<128x128xf32>
    %22 = tpu.matmul %2, %21, %cst_11 {dimension_numbers = #tpu.dot_dimension_numbers<[1], [0], [0], [1], [0, 0, 1, 1], [], []>} : vector<128x64xf32>, vector<64x128xf32>, vector<128x128xf32> -> vector<128x128xf32>
    %23 = vector.extract_strided_slice %22 {offsets = [0, 0], sizes = [64, 128], strides = [1, 1]} : vector<128x128xf32> to vector<64x128xf32>
    %24 = vector.extract_strided_slice %1 {offsets = [0, 3], sizes = [64, 1], strides = [1, 1]} : vector<64x8xf32> to vector<64x1xf32>
    %25 = vector.broadcast %24 : vector<64x1xf32> to vector<64x128xf32>
    %26 = arith.cmpf ogt, %23, %25 : vector<64x128xf32>
    %27 = vector.extract_strided_slice %22 {offsets = [64, 0], sizes = [64, 128], strides = [1, 1]} : vector<128x128xf32> to vector<64x128xf32>
    %28 = vector.extract_strided_slice %1 {offsets = [0, 5], sizes = [64, 1], strides = [1, 1]} : vector<64x8xf32> to vector<64x1xf32>
    %29 = vector.broadcast %28 : vector<64x1xf32> to vector<64x128xf32>
    %30 = arith.addf %27, %29 : vector<64x128xf32>
    %cst_12 = arith.constant 0.000000e+00 : f32
    %31 = vector.broadcast %cst_12 : f32 to vector<64x128xf32>
    %32 = arith.maximumf %30, %31 : vector<64x128xf32>
    %33 = vector.extract_strided_slice %1 {offsets = [0, 4], sizes = [64, 1], strides = [1, 1]} : vector<64x8xf32> to vector<64x1xf32>
    %cst_13 = arith.constant 0.000000e+00 : f32
    %34 = vector.shape_cast %33 : vector<64x1xf32> to vector<64x1xf32>
    %35 = vector.broadcast %34 : vector<64x1xf32> to vector<64x128xf32>
    %36 = vector.broadcast %cst_13 : f32 to vector<64x128xf32>
    %37 = arith.select %26, %35, %36 : vector<64x128xi1>, vector<64x128xf32>
    %38 = tpu.concatenate %32, %37 in 0 : vector<64x128xf32>, vector<64x128xf32> -> vector<128x128xf32>
    %cst_14 = arith.constant dense<0.000000e+00> : vector<136x128xf32>
    %39 = tpu.matmul %3, %38, %cst_14 {dimension_numbers = #tpu.dot_dimension_numbers<[1], [0], [0], [1], [0, 0, 1, 1], [], []>} : vector<136x128xf32>, vector<128x128xf32>, vector<136x128xf32> -> vector<136x128xf32>
    %40 = vector.extract_strided_slice %39 {offsets = [0, 0], sizes = [64, 128], strides = [1, 1]} : vector<136x128xf32> to vector<64x128xf32>
    %41 = vector.extract_strided_slice %1 {offsets = [0, 6], sizes = [64, 1], strides = [1, 1]} : vector<64x8xf32> to vector<64x1xf32>
    %42 = vector.broadcast %41 : vector<64x1xf32> to vector<64x128xf32>
    %43 = arith.cmpf ogt, %40, %42 : vector<64x128xf32>
    %44 = vector.extract_strided_slice %39 {offsets = [64, 0], sizes = [64, 128], strides = [1, 1]} : vector<136x128xf32> to vector<64x128xf32>
    %cst_15 = arith.constant 0.000000e+00 : f32
    %45 = vector.broadcast %cst_15 : f32 to vector<64x128xf32>
    %46 = arith.select %43, %44, %45 : vector<64x128xi1>, vector<64x128xf32>
    %47 = vector.extract_strided_slice %39 {offsets = [128, 0], sizes = [2, 128], strides = [1, 1]} : vector<136x128xf32> to vector<2x128xf32>
    %48 = vector.extract_strided_slice %1 {offsets = [0, 7], sizes = [2, 1], strides = [1, 1]} : vector<64x8xf32> to vector<2x1xf32>
    %49 = vector.broadcast %48 : vector<2x1xf32> to vector<2x128xf32>
    %50 = arith.addf %47, %49 : vector<2x128xf32>
    %cst_16 = arith.constant dense<0.000000e+00> : vector<8x128xf32>
    %51 = tpu.matmul %4, %46, %cst_16 {dimension_numbers = #tpu.dot_dimension_numbers<[1], [0], [0], [1], [0, 0, 1, 1], [], []>} : vector<8x64xf32>, vector<64x128xf32>, vector<8x128xf32> -> vector<8x128xf32>
    %52 = math.exp %50 : vector<2x128xf32>
    %53 = vector.extract_strided_slice %52 {offsets = [0, 0], sizes = [1, 128], strides = [1, 1]} : vector<2x128xf32> to vector<1x128xf32>
    %54 = vector.extract_strided_slice %52 {offsets = [1, 0], sizes = [1, 128], strides = [1, 1]} : vector<2x128xf32> to vector<1x128xf32>
    %55 = vector.extract_strided_slice %50 {offsets = [0, 0], sizes = [1, 128], strides = [1, 1]} : vector<2x128xf32> to vector<1x128xf32>
    %56 = vector.extract_strided_slice %51 {offsets = [0, 0], sizes = [1, 128], strides = [1, 1]} : vector<8x128xf32> to vector<1x128xf32>
    %57 = vector.extract_strided_slice %51 {offsets = [1, 0], sizes = [1, 128], strides = [1, 1]} : vector<8x128xf32> to vector<1x128xf32>
    %58 = vector.extract_strided_slice %0 {offsets = [1, 0], sizes = [1, 128], strides = [1, 1]} : vector<6x128xf32> to vector<1x128xf32>
    %59 = vector.extract_strided_slice %0 {offsets = [5, 0], sizes = [1, 128], strides = [1, 1]} : vector<6x128xf32> to vector<1x128xf32>
    %60 = arith.mulf %53, %58 : vector<1x128xf32>
    %61 = arith.addf %60, %55 : vector<1x128xf32>
    %cst_17 = arith.constant 1.000000e+00 : f32
    %62 = vector.broadcast %cst_17 : f32 to vector<1x128xf32>
    %63 = arith.addf %60, %62 : vector<1x128xf32>
    %64 = arith.mulf %56, %63 : vector<1x128xf32>
    %65 = arith.mulf %54, %59 : vector<1x128xf32>
    %cst_18 = arith.constant 1.000000e+00 : f32
    %66 = vector.broadcast %cst_18 : f32 to vector<1x128xf32>
    %67 = arith.addf %65, %66 : vector<1x128xf32>
    %68 = arith.mulf %57, %67 : vector<1x128xf32>
    %69 = arith.mulf %6, %6 : vector<1x128xf32>
    %70 = arith.mulf %61, %61 : vector<1x128xf32>
    %71 = arith.mulf %6, %61 : vector<1x128xf32>
    %72 = arith.mulf %69, %6 : vector<1x128xf32>
    %73 = arith.mulf %6, %70 : vector<1x128xf32>
    %74 = arith.mulf %69, %61 : vector<1x128xf32>
    %75 = vector.extract_strided_slice %5 {offsets = [0, 0], sizes = [4, 1], strides = [1, 1]} : vector<4x8xf32> to vector<4x1xf32>
    %76 = vector.broadcast %75 : vector<4x1xf32> to vector<4x128xf32>
    %77 = vector.broadcast %6 : vector<1x128xf32> to vector<4x128xf32>
    %78 = arith.mulf %76, %77 : vector<4x128xf32>
    %79 = vector.extract_strided_slice %5 {offsets = [0, 1], sizes = [4, 1], strides = [1, 1]} : vector<4x8xf32> to vector<4x1xf32>
    %80 = vector.broadcast %79 : vector<4x1xf32> to vector<4x128xf32>
    %81 = vector.broadcast %61 : vector<1x128xf32> to vector<4x128xf32>
    %82 = arith.mulf %80, %81 : vector<4x128xf32>
    %83 = arith.addf %78, %82 : vector<4x128xf32>
    %84 = vector.extract_strided_slice %5 {offsets = [0, 2], sizes = [4, 1], strides = [1, 1]} : vector<4x8xf32> to vector<4x1xf32>
    %85 = vector.broadcast %84 : vector<4x1xf32> to vector<4x128xf32>
    %86 = vector.broadcast %69 : vector<1x128xf32> to vector<4x128xf32>
    %87 = arith.mulf %85, %86 : vector<4x128xf32>
    %88 = arith.addf %83, %87 : vector<4x128xf32>
    %89 = vector.extract_strided_slice %5 {offsets = [0, 3], sizes = [4, 1], strides = [1, 1]} : vector<4x8xf32> to vector<4x1xf32>
    %90 = vector.broadcast %89 : vector<4x1xf32> to vector<4x128xf32>
    %91 = vector.broadcast %70 : vector<1x128xf32> to vector<4x128xf32>
    %92 = arith.mulf %90, %91 : vector<4x128xf32>
    %93 = arith.addf %88, %92 : vector<4x128xf32>
    %94 = vector.extract_strided_slice %5 {offsets = [0, 4], sizes = [4, 1], strides = [1, 1]} : vector<4x8xf32> to vector<4x1xf32>
    %95 = vector.broadcast %94 : vector<4x1xf32> to vector<4x128xf32>
    %96 = vector.broadcast %71 : vector<1x128xf32> to vector<4x128xf32>
    %97 = arith.mulf %95, %96 : vector<4x128xf32>
    %98 = arith.addf %93, %97 : vector<4x128xf32>
    %99 = vector.extract_strided_slice %5 {offsets = [0, 5], sizes = [4, 1], strides = [1, 1]} : vector<4x8xf32> to vector<4x1xf32>
    %100 = vector.broadcast %99 : vector<4x1xf32> to vector<4x128xf32>
    %101 = vector.broadcast %72 : vector<1x128xf32> to vector<4x128xf32>
    %102 = arith.mulf %100, %101 : vector<4x128xf32>
    %103 = arith.addf %98, %102 : vector<4x128xf32>
    %104 = vector.extract_strided_slice %5 {offsets = [0, 6], sizes = [4, 1], strides = [1, 1]} : vector<4x8xf32> to vector<4x1xf32>
    %105 = vector.broadcast %104 : vector<4x1xf32> to vector<4x128xf32>
    %106 = vector.broadcast %73 : vector<1x128xf32> to vector<4x128xf32>
    %107 = arith.mulf %105, %106 : vector<4x128xf32>
    %108 = arith.addf %103, %107 : vector<4x128xf32>
    %109 = vector.extract_strided_slice %5 {offsets = [0, 7], sizes = [4, 1], strides = [1, 1]} : vector<4x8xf32> to vector<4x1xf32>
    %110 = vector.broadcast %109 : vector<4x1xf32> to vector<4x128xf32>
    %111 = vector.broadcast %74 : vector<1x128xf32> to vector<4x128xf32>
    %112 = arith.mulf %110, %111 : vector<4x128xf32>
    %113 = arith.addf %108, %112 : vector<4x128xf32>
    %114 = vector.extract_strided_slice %0 {offsets = [0, 0], sizes = [1, 128], strides = [1, 1]} : vector<6x128xf32> to vector<1x128xf32>
    %c0_19 = arith.constant 0 : index
    %c0_20 = arith.constant 0 : index
    %115 = vector.load %arg7[%c0_19, %c0_20] : memref<10x128xf32, #tpu.memory_space<vmem>>, vector<1x128xf32>
    tpu.vector_store %arg7[%c0_19, %c0_20], %114 {strides = array<i32>} : memref<10x128xf32, #tpu.memory_space<vmem>>, vector<1x128xf32>,
    %c1 = arith.constant 1 : index
    %c0_21 = arith.constant 0 : index
    %116 = vector.load %arg7[%c1, %c0_21] : memref<10x128xf32, #tpu.memory_space<vmem>>, vector<1x128xf32>
    tpu.vector_store %arg7[%c1, %c0_21], %61 {strides = array<i32>} : memref<10x128xf32, #tpu.memory_space<vmem>>, vector<1x128xf32>,
    %117 = vector.extract_strided_slice %0 {offsets = [2, 0], sizes = [1, 128], strides = [1, 1]} : vector<6x128xf32> to vector<1x128xf32>
    %c2 = arith.constant 2 : index
    %c0_22 = arith.constant 0 : index
    %118 = vector.load %arg7[%c2, %c0_22] : memref<10x128xf32, #tpu.memory_space<vmem>>, vector<1x128xf32>
    tpu.vector_store %arg7[%c2, %c0_22], %117 {strides = array<i32>} : memref<10x128xf32, #tpu.memory_space<vmem>>, vector<1x128xf32>,
    %119 = vector.extract_strided_slice %0 {offsets = [2, 0], sizes = [1, 128], strides = [1, 1]} : vector<6x128xf32> to vector<1x128xf32>
    %120 = arith.mulf %64, %119 : vector<1x128xf32>
    %121 = vector.extract_strided_slice %0 {offsets = [3, 0], sizes = [1, 128], strides = [1, 1]} : vector<6x128xf32> to vector<1x128xf32>
    %122 = arith.mulf %53, %121 : vector<1x128xf32>
    %123 = arith.addf %120, %122 : vector<1x128xf32>
    %c3 = arith.constant 3 : index
    %c0_23 = arith.constant 0 : index
    %124 = vector.load %arg7[%c3, %c0_23] : memref<10x128xf32, #tpu.memory_space<vmem>>, vector<1x128xf32>
    tpu.vector_store %arg7[%c3, %c0_23], %123 {strides = array<i32>} : memref<10x128xf32, #tpu.memory_space<vmem>>, vector<1x128xf32>,
    %cst_24 = arith.constant 1.000000e+00 : f32
    %125 = vector.broadcast %cst_24 : f32 to vector<1x128xf32>
    %c4 = arith.constant 4 : index
    %c0_25 = arith.constant 0 : index
    %126 = vector.load %arg7[%c4, %c0_25] : memref<10x128xf32, #tpu.memory_space<vmem>>, vector<1x128xf32>
    tpu.vector_store %arg7[%c4, %c0_25], %125 {strides = array<i32>} : memref<10x128xf32, #tpu.memory_space<vmem>>, vector<1x128xf32>,
    %127 = arith.mulf %68, %68 : vector<1x128xf32>
    %128 = arith.mulf %54, %54 : vector<1x128xf32>
    %129 = arith.addf %127, %128 : vector<1x128xf32>
    %130 = math.sqrt %129 : vector<1x128xf32>
    %c5 = arith.constant 5 : index
    %c0_26 = arith.constant 0 : index
    %131 = vector.load %arg7[%c5, %c0_26] : memref<10x128xf32, #tpu.memory_space<vmem>>, vector<1x128xf32>
    tpu.vector_store %arg7[%c5, %c0_26], %130 {strides = array<i32>} : memref<10x128xf32, #tpu.memory_space<vmem>>, vector<1x128xf32>,
    %132 = vector.extract_strided_slice %0 {offsets = [0, 0], sizes = [4, 128], strides = [1, 1]} : vector<6x128xf32> to vector<4x128xf32>
    %133 = arith.subf %113, %132 : vector<4x128xf32>
    %c6 = arith.constant 6 : index
    %c0_27 = arith.constant 0 : index
    %134 = vector.load %arg7[%c6, %c0_27] : memref<10x128xf32, #tpu.memory_space<vmem>>, vector<4x128xf32>
    tpu.vector_store %arg7[%c6, %c0_27], %133 {strides = array<i32>} : memref<10x128xf32, #tpu.memory_space<vmem>>, vector<4x128xf32>,
    return
  }
  func.func @transform_0(%arg0: i32) -> (i32, i32) {
    %c0_i32 = arith.constant 0 : i32
    %c0_i32_0 = arith.constant 0 : i32
    return %c0_i32, %arg0 : i32, i32
  }
  func.func @transform_1(%arg0: i32) -> (i32, i32) {
    %c0_i32 = arith.constant 0 : i32
    %c0_i32_0 = arith.constant 0 : i32
    %c0_i32_1 = arith.constant 0 : i32
    return %c0_i32, %c0_i32_0 : i32, i32
  }
  func.func @transform_2(%arg0: i32) -> (i32, i32) {
    %c0_i32 = arith.constant 0 : i32
    %c0_i32_0 = arith.constant 0 : i32
    %c0_i32_1 = arith.constant 0 : i32
    return %c0_i32, %c0_i32_0 : i32, i32
  }
  func.func @transform_3(%arg0: i32) -> (i32, i32) {
    %c0_i32 = arith.constant 0 : i32
    %c0_i32_0 = arith.constant 0 : i32
    %c0_i32_1 = arith.constant 0 : i32
    return %c0_i32, %c0_i32_0 : i32, i32
  }
  func.func @transform_4(%arg0: i32) -> (i32, i32) {
    %c0_i32 = arith.constant 0 : i32
    %c0_i32_0 = arith.constant 0 : i32
    %c0_i32_1 = arith.constant 0 : i32
    return %c0_i32, %c0_i32_0 : i32, i32
  }
  func.func @transform_5(%arg0: i32) -> (i32, i32) {
    %c0_i32 = arith.constant 0 : i32
    %c0_i32_0 = arith.constant 0 : i32
    %c0_i32_1 = arith.constant 0 : i32
    return %c0_i32, %c0_i32_0 : i32, i32
  }
  func.func @transform_6(%arg0: i32) -> (i32, i32) {
    %c0_i32 = arith.constant 0 : i32
    %c0_i32_0 = arith.constant 0 : i32
    return %c0_i32, %arg0 : i32, i32
  }
}

</mosaic_0001>

<llo_original>
// kernel: tpu_custom_call.1
$region0: #{tpu_custom_call.1}
  #allocation0 [shape = 'u32[]', space=smem, size = 0x4, offset = 0x4, fixed_abs, tag = 'smem constant byte address 0x4 - core index']
  #allocation1 [shape = 'u32[144,128]{1,0:T(1,128)}', space=vmem, size = 0x12000, scoped, tag = 'internal scratch']
  %s0 = inlined_call_operand.vmem [shape: f32[6,128], index: 0, kind: input, shape index: {}]
  %s1 = inlined_call_operand.vmem [shape: f32[64,8], index: 1, kind: input, shape index: {}]
  %s2 = inlined_call_operand.vmem [shape: f32[128,64], index: 2, kind: input, shape index: {}]
  %s3 = inlined_call_operand.vmem [shape: f32[136,128], index: 3, kind: input, shape index: {}]
  %s4 = inlined_call_operand.vmem [shape: f32[8,64], index: 4, kind: input, shape index: {}]
  %s5 = inlined_call_operand.vmem [shape: f32[4,8], index: 5, kind: input, shape index: {}]
  %s6 = inlined_call_operand.hbm [shape: f32[10,128], index: 6, kind: output, shape index: {}]
  %s7 = sld [smem:[#allocation0]]
  $region34: #{tpu_custom_call.1} parent=0
    _
  %s9 = ssub.s32 1, %s7
  %s10 = scalar_select 0, %s9, %s7
  $region1: #{tpu_custom_call.1} parent=0
    #allocation2 [shape = 'u8[8192]{0}', space=vmem, size = 0x2000, scoped, tag = 'output window, operand 0, single buffered']
    #allocation3 [shape = 's32[1]{0}', space=sflag, size = 0x4, scoped, tag = 'scoped memory for tpu_custom_call.1']
    %11 = vsyncpa [#allocation3], 0
    // Predicated region
    $region2: #{tpu_custom_call.1} parent=1 // pred_check
      _
    $region3: #{tpu_custom_call.1} parent=1 // pred_check_branch
      %13 = sbr.rel (0) target = $region5
    $region4: #{tpu_custom_call.1} parent=1 // pred_region
      _
    $region5: #{tpu_custom_call.1} parent=1 // pred_fallthru
      _
    // Predicated region
    $region6: #{tpu_custom_call.1} parent=1 // pred_check
      _
    $region7: #{tpu_custom_call.1} parent=1 // pred_check_branch
      %15 = sbr.rel (0) target = $region9
    $region8: #{tpu_custom_call.1} parent=1 // pred_region
      _
    $region9: #{tpu_custom_call.1} parent=1 // pred_fallthru
      _
    // Predicated region
    $region10: #{tpu_custom_call.1} parent=1 // pred_check
      _
    $region11: #{tpu_custom_call.1} parent=1 // pred_check_branch
      %17 = sbr.rel (0) target = $region13
    $region12: #{tpu_custom_call.1} parent=1 // pred_region
      _
    $region13: #{tpu_custom_call.1} parent=1 // pred_fallthru
      _
    // Predicated region
    $region14: #{tpu_custom_call.1} parent=1 // pred_check
      _
    $region15: #{tpu_custom_call.1} parent=1 // pred_check_branch
      %19 = sbr.rel (0) target = $region17
    $region16: #{tpu_custom_call.1} parent=1 // pred_region
      _
    $region17: #{tpu_custom_call.1} parent=1 // pred_fallthru
      _
    // Predicated region
    $region18: #{tpu_custom_call.1} parent=1 // pred_check
      _
    $region19: #{tpu_custom_call.1} parent=1 // pred_check_branch
      %21 = sbr.rel (0) target = $region21
    $region20: #{tpu_custom_call.1} parent=1 // pred_region
      _
    $region21: #{tpu_custom_call.1} parent=1 // pred_fallthru
      _
    // Predicated region
    $region22: #{tpu_custom_call.1} parent=1 // pred_check
      _
    $region23: #{tpu_custom_call.1} parent=1 // pred_check_branch
      %23 = sbr.rel (0) target = $region25
    $region24: #{tpu_custom_call.1} parent=1 // pred_region
      _
    $region25: #{tpu_custom_call.1} parent=1 // pred_fallthru
      _
    %v24 = vld [vmem:[%s0] sm:$0x3f]
    %v25 = vld [vmem:[%s1] sm:$0xff]
    %v26 = vld [vmem:[%s1 + $0x8] sm:$0xff]
    %v27 = vld [vmem:[%s1 + $0x10] sm:$0xff]
    %v28 = vld [vmem:[%s1 + $0x18] sm:$0xff]
    %v29 = vld [vmem:[%s1 + $0x20] sm:$0xff]
    %v30 = vld [vmem:[%s1 + $0x28] sm:$0xff]
    %v31 = vld [vmem:[%s1 + $0x30] sm:$0xff]
    %v32 = vld [vmem:[%s1 + $0x38] sm:$0xff]
    %v33 = vld [vmem:[%s2] sm:$0xff]
    %v34 = vld [vmem:[%s2 + $0x8] sm:$0xff]
    %v35 = vld [vmem:[%s2 + $0x10] sm:$0xff]
    %v36 = vld [vmem:[%s2 + $0x18] sm:$0xff]
    %v37 = vld [vmem:[%s2 + $0x20] sm:$0xff]
    %v38 = vld [vmem:[%s2 + $0x28] sm:$0xff]
    %v39 = vld [vmem:[%s2 + $0x30] sm:$0xff]
    %v40 = vld [vmem:[%s2 + $0x38] sm:$0xff]
    %v41 = vld [vmem:[%s2 + $0x40] sm:$0xff]
    %v42 = vld [vmem:[%s2 + $0x48] sm:$0xff]
    %v43 = vld [vmem:[%s2 + $0x50] sm:$0xff]
    %v44 = vld [vmem:[%s2 + $0x58] sm:$0xff]
    %v45 = vld [vmem:[%s2 + $0x60] sm:$0xff]
    %v46 = vld [vmem:[%s2 + $0x68] sm:$0xff]
    %v47 = vld [vmem:[%s2 + $0x70] sm:$0xff]
    %v48 = vld [vmem:[%s2 + $0x78] sm:$0xff]
    %v49 = vld [vmem:[%s3] sm:$0xff]
    %v50 = vld [vmem:[%s3 + $0x8] sm:$0xff]
    %v51 = vld [vmem:[%s3 + $0x10] sm:$0xff]
    %v52 = vld [vmem:[%s3 + $0x18] sm:$0xff]
    %v53 = vld [vmem:[%s3 + $0x20] sm:$0xff]
    %v54 = vld [vmem:[%s3 + $0x28] sm:$0xff]
    %v55 = vld [vmem:[%s3 + $0x30] sm:$0xff]
    %v56 = vld [vmem:[%s3 + $0x38] sm:$0xff]
    %v57 = vld [vmem:[%s3 + $0x40] sm:$0xff]
    %v58 = vld [vmem:[%s3 + $0x48] sm:$0xff]
    %v59 = vld [vmem:[%s3 + $0x50] sm:$0xff]
    %v60 = vld [vmem:[%s3 + $0x58] sm:$0xff]
    %v61 = vld [vmem:[%s3 + $0x60] sm:$0xff]
    %v62 = vld [vmem:[%s3 + $0x68] sm:$0xff]
    %v63 = vld [vmem:[%s3 + $0x70] sm:$0xff]
    %v64 = vld [vmem:[%s3 + $0x78] sm:$0xff]
    %v65 = vld [vmem:[%s3 + $0x80] sm:$0xff]
    %v66 = vld [vmem:[%s4] sm:$0xff]
    %v67 = vld [vmem:[%s5] sm:$0xf]
    %69 = vset.pattern.permute.xlu0 0
    %70 = vperm.xlu0 %69, %v25
    %v71 = vpop.permute.xlu0 %70
    %74 = vset.pattern.permute.xlu0 0
    %75 = vperm.xlu0 %74, %v26
    %v76 = vpop.permute.xlu0 %75
    %79 = vset.pattern.permute.xlu0 0
    %80 = vperm.xlu0 %79, %v27
    %v81 = vpop.permute.xlu0 %80
    %84 = vset.pattern.permute.xlu0 0
    %85 = vperm.xlu0 %84, %v28
    %v86 = vpop.permute.xlu0 %85
    %89 = vset.pattern.permute.xlu0 0
    %90 = vperm.xlu0 %89, %v29
    %v91 = vpop.permute.xlu0 %90
    %94 = vset.pattern.permute.xlu0 0
    %95 = vperm.xlu0 %94, %v30
    %v96 = vpop.permute.xlu0 %95
    %99 = vset.pattern.permute.xlu0 0
    %100 = vperm.xlu0 %99, %v31
    %v101 = vpop.permute.xlu0 %100
    %104 = vset.pattern.permute.xlu0 0
    %105 = vperm.xlu0 %104, %v32
    %v106 = vpop.permute.xlu0 %105
    %v108 = vlaneseq
    %v109 = vshrl.u32 %v108, 7
    %v110 = vsub.s32 0, %v109
    %v111 = vrot.slane %v24, %v110
    %v112 = vmul.f32 %v71, %v111
    %v113 = vmul.f32 %v76, %v111
    %v114 = vmul.f32 %v81, %v111
    %v115 = vmul.f32 %v86, %v111
    %v116 = vmul.f32 %v91, %v111
    %v117 = vmul.f32 %v96, %v111
    %v118 = vmul.f32 %v101, %v111
    %v119 = vmul.f32 %v106, %v111
    %120 = vset.pattern.permute.xlu0 1
    %121 = vperm.xlu0 %120, %v25
    %v122 = vpop.permute.xlu0 %121
    %124 = vset.pattern.permute.xlu0 1
    %125 = vperm.xlu0 %124, %v26
    %v126 = vpop.permute.xlu0 %125
    %128 = vset.pattern.permute.xlu0 1
    %129 = vperm.xlu0 %128, %v27
    %v130 = vpop.permute.xlu0 %129
    %132 = vset.pattern.permute.xlu0 1
    %133 = vperm.xlu0 %132, %v28
    %v134 = vpop.permute.xlu0 %133
    %136 = vset.pattern.permute.xlu0 1
    %137 = vperm.xlu0 %136, %v29
    %v138 = vpop.permute.xlu0 %137
    %140 = vset.pattern.permute.xlu0 1
    %141 = vperm.xlu0 %140, %v30
    %v142 = vpop.permute.xlu0 %141
    %144 = vset.pattern.permute.xlu0 1
    %145 = vperm.xlu0 %144, %v31
    %v146 = vpop.permute.xlu0 %145
    %148 = vset.pattern.permute.xlu0 1
    %149 = vperm.xlu0 %148, %v32
    %v150 = vpop.permute.xlu0 %149
    %v152 = vlaneseq
    %v153 = vshrl.u32 %v152, 7
    %v154 = vsub.s32 4, %v153
    %v155 = vrot.slane %v24, %v154
    %v156 = vmul.f32 %v122, %v155
    %v157 = vmul.f32 %v126, %v155
    %v158 = vmul.f32 %v130, %v155
    %v159 = vmul.f32 %v134, %v155
    %v160 = vmul.f32 %v138, %v155
    %v161 = vmul.f32 %v142, %v155
    %v162 = vmul.f32 %v146, %v155
    %v163 = vmul.f32 %v150, %v155
    %v164 = vadd.f32 %v112, %v156
    %v165 = vadd.f32 %v113, %v157
    %v166 = vadd.f32 %v114, %v158
    %v167 = vadd.f32 %v115, %v159
    %v168 = vadd.f32 %v116, %v160
    %v169 = vadd.f32 %v117, %v161
    %v170 = vadd.f32 %v118, %v162
    %v171 = vadd.f32 %v119, %v163
    %172 = vset.pattern.permute.xlu0 2
    %173 = vperm.xlu0 %172, %v25
    %v174 = vpop.permute.xlu0 %173
    %176 = vset.pattern.permute.xlu0 2
    %177 = vperm.xlu0 %176, %v26
    %v178 = vpop.permute.xlu0 %177
    %180 = vset.pattern.permute.xlu0 2
    %181 = vperm.xlu0 %180, %v27
    %v182 = vpop.permute.xlu0 %181
    %184 = vset.pattern.permute.xlu0 2
    %185 = vperm.xlu0 %184, %v28
    %v186 = vpop.permute.xlu0 %185
    %188 = vset.pattern.permute.xlu0 2
    %189 = vperm.xlu0 %188, %v29
    %v190 = vpop.permute.xlu0 %189
    %192 = vset.pattern.permute.xlu0 2
    %193 = vperm.xlu0 %192, %v30
    %v194 = vpop.permute.xlu0 %193
    %196 = vset.pattern.permute.xlu0 2
    %197 = vperm.xlu0 %196, %v31
    %v198 = vpop.permute.xlu0 %197
    %200 = vset.pattern.permute.xlu0 2
    %201 = vperm.xlu0 %200, %v32
    %v202 = vpop.permute.xlu0 %201
    %v204 = vadd.f32 %v164, %v174
    %v205 = vadd.f32 %v165, %v178
    %v206 = vadd.f32 %v166, %v182
    %v207 = vadd.f32 %v167, %v186
    %v208 = vadd.f32 %v168, %v190
    %v209 = vadd.f32 %v169, %v194
    %v210 = vadd.f32 %v170, %v198
    %v211 = vadd.f32 %v171, %v202
    %v212 = vmax.f32 %v204, 0.0
    %v213 = vmax.f32 %v205, 0.0
    %v214 = vmax.f32 %v206, 0.0
    %v215 = vmax.f32 %v207, 0.0
    %v216 = vmax.f32 %v208, 0.0
    %v217 = vmax.f32 %v209, 0.0
    %v218 = vmax.f32 %v210, 0.0
    %v219 = vmax.f32 %v211, 0.0
    %vm220 = vcmask 523264
    %v222 = vsel %vm220, %v33, 0
    %v225 = vsel %vm220, %v34, 0
    %v228 = vsel %vm220, %v35, 0
    %v231 = vsel %vm220, %v36, 0
    %v234 = vsel %vm220, %v37, 0
    %v237 = vsel %vm220, %v38, 0
    %v240 = vsel %vm220, %v39, 0
    %v243 = vsel %vm220, %v40, 0
    %v246 = vsel %vm220, %v41, 0
    %v249 = vsel %vm220, %v42, 0
    %v252 = vsel %vm220, %v43, 0
    %v255 = vsel %vm220, %v44, 0
    %v258 = vsel %vm220, %v45, 0
    %v261 = vsel %vm220, %v46, 0
    %v264 = vsel %vm220, %v47, 0
    %v267 = vsel %vm220, %v48, 0
    %269 = vmatprep.subr.mxu0 0.0
    %270 = vmatpush1.msra.mxu0 %v212
    %271 = vmatprep.subr.mxu0 0.0
    %272 = vmatpush1.msra.mxu0 %v213
    %273 = vmatprep.subr.mxu0 0.0
    %274 = vmatpush1.msra.mxu0 %v214
    %275 = vmatprep.subr.mxu0 0.0
    %276 = vmatpush1.msra.mxu0 %v215
    %277 = vmatprep.subr.mxu0 0.0
    %278 = vmatpush1.msra.mxu0 %v216
    %279 = vmatprep.subr.mxu0 0.0
    %280 = vmatpush1.msra.mxu0 %v217
    %281 = vmatprep.subr.mxu0 0.0
    %282 = vmatpush1.msra.mxu0 %v218
    %283 = vmatprep.subr.mxu0 0.0
    %284 = vmatpush1.msra.mxu0 %v219
    %285 = vmatprep.subr.mxu0 0.0
    %286 = vmatpush1.msra.mxu0 0.0
    %287 = vmatprep.subr.mxu0 0.0
    %288 = vmatpush1.msra.mxu0 0.0
    %289 = vmatprep.subr.mxu0 0.0
    %290 = vmatpush1.msra.mxu0 0.0
    %291 = vmatprep.subr.mxu0 0.0
    %292 = vmatpush1.msra.mxu0 0.0
    %293 = vmatprep.subr.mxu0 0.0
    %294 = vmatpush1.msra.mxu0 0.0
    %295 = vmatprep.subr.mxu0 0.0
    %296 = vmatpush1.msra.mxu0 0.0
    %297 = vmatprep.subr.mxu0 0.0
    %298 = vmatpush1.msra.mxu0 0.0
    %299 = vmatprep.subr.mxu0 0.0
    %300 = vmatpush1.msra.mxu0 0.0
    %301 = vmatprep.subr.mxu0 0.0
    %302 = vmatpush1.msra.mxu0 0.0
    %303 = vmatprep.subr.mxu0 0.0
    %304 = vmatpush1.msra.mxu0 0.0
    %305 = vmatprep.subr.mxu0 0.0
    %306 = vmatpush1.msra.mxu0 0.0
    %307 = vmatprep.subr.mxu0 0.0
    %308 = vmatpush1.msra.mxu0 0.0
    %309 = vmatprep.subr.mxu0 0.0
    %310 = vmatpush1.msra.mxu0 0.0
    %311 = vmatprep.subr.mxu0 0.0
    %312 = vmatpush1.msra.mxu0 0.0
    %313 = vmatprep.subr.mxu0 0.0
    %314 = vmatpush1.msra.mxu0 0.0
    %315 = vmatprep.subr.mxu0 0.0
    %316 = vmatpush1.msra.mxu0 0.0
    %317 = vmatprep.subr.mxu0 0.0
    %318 = vmatpush1.msra.mxu0 0.0
    %319 = vmatprep.subr.mxu0 0.0
    %320 = vmatpush1.msra.mxu0 0.0
    %321 = vmatprep.subr.mxu0 0.0
    %322 = vmatpush1.msra.mxu0 0.0
    %323 = vmatprep.subr.mxu0 0.0
    %324 = vmatpush1.msra.mxu0 0.0
    %325 = vmatprep.subr.mxu0 0.0
    %326 = vmatpush1.msra.mxu0 0.0
    %327 = vmatprep.subr.mxu0 0.0
    %328 = vmatpush1.msra.mxu0 0.0
    %329 = vmatprep.subr.mxu0 0.0
    %330 = vmatpush1.msra.mxu0 0.0
    %331 = vmatprep.subr.mxu0 0.0
    %332 = vmatpush1.msra.mxu0 0.0
    %333 = vmatprep.mubr.f32.mxu0 0.0
    %334 = vmatmul.mubr.f32.gmra.mrb[0].mxu0 %v222
    %v335 = vpop.f32.mrb[0].mxu0
    %v336 = vadd.f32 0.0, %v335
    %v337 = vpop.f32.mrb[0].mxu0
    %338 = vmatprep.mubr.f32.mxu0 0.0
    %339 = vmatmul.mubr.f32.gmra.mrb[0].mxu0 %v225
    %v340 = vpop.f32.mrb[0].mxu0
    %v341 = vadd.f32 0.0, %v340
    %v342 = vpop.f32.mrb[0].mxu0
    %343 = vmatprep.mubr.f32.mxu0 0.0
    %344 = vmatmul.mubr.f32.gmra.mrb[0].mxu0 %v228
    %v345 = vpop.f32.mrb[0].mxu0
    %v346 = vadd.f32 0.0, %v345
    %v347 = vpop.f32.mrb[0].mxu0
    %348 = vmatprep.mubr.f32.mxu0 0.0
    %349 = vmatmul.mubr.f32.gmra.mrb[0].mxu0 %v231
    %v350 = vpop.f32.mrb[0].mxu0
    %v351 = vadd.f32 0.0, %v350
    %v352 = vpop.f32.mrb[0].mxu0
    %353 = vmatprep.mubr.f32.mxu0 0.0
    %354 = vmatmul.mubr.f32.gmra.mrb[0].mxu0 %v234
    %v355 = vpop.f32.mrb[0].mxu0
    %v356 = vadd.f32 0.0, %v355
    %v357 = vpop.f32.mrb[0].mxu0
    %358 = vmatprep.mubr.f32.mxu0 0.0
    %359 = vmatmul.mubr.f32.gmra.mrb[0].mxu0 %v237
    %v360 = vpop.f32.mrb[0].mxu0
    %v361 = vadd.f32 0.0, %v360
    %v362 = vpop.f32.mrb[0].mxu0
    %363 = vmatprep.mubr.f32.mxu0 0.0
    %364 = vmatmul.mubr.f32.gmra.mrb[0].mxu0 %v240
    %v365 = vpop.f32.mrb[0].mxu0
    %v366 = vadd.f32 0.0, %v365
    %v367 = vpop.f32.mrb[0].mxu0
    %368 = vmatprep.mubr.f32.mxu0 0.0
    %369 = vmatmul.mubr.f32.gmra.mrb[0].mxu0 %v243
    %v370 = vpop.f32.mrb[0].mxu0
    %v371 = vadd.f32 0.0, %v370
    %v372 = vpop.f32.mrb[0].mxu0
    %373 = vmatprep.mubr.f32.mxu0 0.0
    %374 = vmatmul.mubr.f32.gmra.mrb[0].mxu0 %v246
    %v375 = vpop.f32.mrb[0].mxu0
    %v376 = vadd.f32 0.0, %v375
    %v377 = vpop.f32.mrb[0].mxu0
    %378 = vmatprep.mubr.f32.mxu0 0.0
    %379 = vmatmul.mubr.f32.gmra.mrb[0].mxu0 %v249
    %v380 = vpop.f32.mrb[0].mxu0
    %v381 = vadd.f32 0.0, %v380
    %v382 = vpop.f32.mrb[0].mxu0
    %383 = vmatprep.mubr.f32.mxu0 0.0
    %384 = vmatmul.mubr.f32.gmra.mrb[0].mxu0 %v252
    %v385 = vpop.f32.mrb[0].mxu0
    %v386 = vadd.f32 0.0, %v385
    %v387 = vpop.f32.mrb[0].mxu0
    %388 = vmatprep.mubr.f32.mxu0 0.0
    %389 = vmatmul.mubr.f32.gmra.mrb[0].mxu0 %v255
    %v390 = vpop.f32.mrb[0].mxu0
    %v391 = vadd.f32 0.0, %v390
    %v392 = vpop.f32.mrb[0].mxu0
    %393 = vmatprep.mubr.f32.mxu0 0.0
    %394 = vmatmul.mubr.f32.gmra.mrb[0].mxu0 %v258
    %v395 = vpop.f32.mrb[0].mxu0
    %v396 = vadd.f32 0.0, %v395
    %v397 = vpop.f32.mrb[0].mxu0
    %398 = vmatprep.mubr.f32.mxu0 0.0
    %399 = vmatmul.mubr.f32.gmra.mrb[0].mxu0 %v261
    %v400 = vpop.f32.mrb[0].mxu0
    %v401 = vadd.f32 0.0, %v400
    %v402 = vpop.f32.mrb[0].mxu0
    %403 = vmatprep.mubr.f32.mxu0 0.0
    %404 = vmatmul.mubr.f32.gmra.mrb[0].mxu0 %v264
    %v405 = vpop.f32.mrb[0].mxu0
    %v406 = vadd.f32 0.0, %v405
    %v407 = vpop.f32.mrb[0].mxu0
    %408 = vmatprep.mubr.f32.mxu0 0.0
    %409 = vmatmul.mubr.f32.gmra.mrb[0].mxu0 %v267
    %v410 = vpop.f32.mrb[0].mxu0
    %v411 = vadd.f32 0.0, %v410
    %v412 = vpop.f32.mrb[0].mxu0
    %413 = vdwg.mxu0
    %414 = vset.pattern.permute.xlu0 3
    %415 = vperm.xlu0 %414, %v25
    %v416 = vpop.permute.xlu0 %415
    %418 = vset.pattern.permute.xlu0 3
    %419 = vperm.xlu0 %418, %v26
    %v420 = vpop.permute.xlu0 %419
    %422 = vset.pattern.permute.xlu0 3
    %423 = vperm.xlu0 %422, %v27
    %v424 = vpop.permute.xlu0 %423
    %426 = vset.pattern.permute.xlu0 3
    %427 = vperm.xlu0 %426, %v28
    %v428 = vpop.permute.xlu0 %427
    %430 = vset.pattern.permute.xlu0 3
    %431 = vperm.xlu0 %430, %v29
    %v432 = vpop.permute.xlu0 %431
    %434 = vset.pattern.permute.xlu0 3
    %435 = vperm.xlu0 %434, %v30
    %v436 = vpop.permute.xlu0 %435
    %438 = vset.pattern.permute.xlu0 3
    %439 = vperm.xlu0 %438, %v31
    %v440 = vpop.permute.xlu0 %439
    %442 = vset.pattern.permute.xlu0 3
    %443 = vperm.xlu0 %442, %v32
    %v444 = vpop.permute.xlu0 %443
    %vm446 = vcmp.gt.f32.partialorder %v336, %v416
    %vm447 = vcmp.gt.f32.partialorder %v341, %v420
    %vm448 = vcmp.gt.f32.partialorder %v346, %v424
    %vm449 = vcmp.gt.f32.partialorder %v351, %v428
    %vm450 = vcmp.gt.f32.partialorder %v356, %v432
    %vm451 = vcmp.gt.f32.partialorder %v361, %v436
    %vm452 = vcmp.gt.f32.partialorder %v366, %v440
    %vm453 = vcmp.gt.f32.partialorder %v371, %v444
    %454 = vset.pattern.permute.xlu0 5
    %455 = vperm.xlu0 %454, %v25
    %v456 = vpop.permute.xlu0 %455
    %458 = vset.pattern.permute.xlu0 5
    %459 = vperm.xlu0 %458, %v26
    %v460 = vpop.permute.xlu0 %459
    %462 = vset.pattern.permute.xlu0 5
    %463 = vperm.xlu0 %462, %v27
    %v464 = vpop.permute.xlu0 %463
    %466 = vset.pattern.permute.xlu0 5
    %467 = vperm.xlu0 %466, %v28
    %v468 = vpop.permute.xlu0 %467
    %470 = vset.pattern.permute.xlu0 5
    %471 = vperm.xlu0 %470, %v29
    %v472 = vpop.permute.xlu0 %471
    %474 = vset.pattern.permute.xlu0 5
    %475 = vperm.xlu0 %474, %v30
    %v476 = vpop.permute.xlu0 %475
    %478 = vset.pattern.permute.xlu0 5
    %479 = vperm.xlu0 %478, %v31
    %v480 = vpop.permute.xlu0 %479
    %482 = vset.pattern.permute.xlu0 5
    %483 = vperm.xlu0 %482, %v32
    %v484 = vpop.permute.xlu0 %483
    %v486 = vadd.f32 %v376, %v456
    %v487 = vadd.f32 %v381, %v460
    %v488 = vadd.f32 %v386, %v464
    %v489 = vadd.f32 %v391, %v468
    %v490 = vadd.f32 %v396, %v472
    %v491 = vadd.f32 %v401, %v476
    %v492 = vadd.f32 %v406, %v480
    %v493 = vadd.f32 %v411, %v484
    %v494 = vmax.f32 %v486, 0.0
    %v495 = vmax.f32 %v487, 0.0
    %v496 = vmax.f32 %v488, 0.0
    %v497 = vmax.f32 %v489, 0.0
    %v498 = vmax.f32 %v490, 0.0
    %v499 = vmax.f32 %v491, 0.0
    %v500 = vmax.f32 %v492, 0.0
    %v501 = vmax.f32 %v493, 0.0
    %502 = vset.pattern.permute.xlu0 4
    %503 = vperm.xlu0 %502, %v25
    %v504 = vpop.permute.xlu0 %503
    %506 = vset.pattern.permute.xlu0 4
    %507 = vperm.xlu0 %506, %v26
    %v508 = vpop.permute.xlu0 %507
    %510 = vset.pattern.permute.xlu0 4
    %511 = vperm.xlu0 %510, %v27
    %v512 = vpop.permute.xlu0 %511
    %514 = vset.pattern.permute.xlu0 4
    %515 = vperm.xlu0 %514, %v28
    %v516 = vpop.permute.xlu0 %515
    %518 = vset.pattern.permute.xlu0 4
    %519 = vperm.xlu0 %518, %v29
    %v520 = vpop.permute.xlu0 %519
    %522 = vset.pattern.permute.xlu0 4
    %523 = vperm.xlu0 %522, %v30
    %v524 = vpop.permute.xlu0 %523
    %526 = vset.pattern.permute.xlu0 4
    %527 = vperm.xlu0 %526, %v31
    %v528 = vpop.permute.xlu0 %527
    %530 = vset.pattern.permute.xlu0 4
    %531 = vperm.xlu0 %530, %v32
    %v532 = vpop.permute.xlu0 %531
    %v534 = vsel %vm446, %v504, 0.0
    %v535 = vsel %vm447, %v508, 0.0
    %v536 = vsel %vm448, %v512, 0.0
    %v537 = vsel %vm449, %v516, 0.0
    %v538 = vsel %vm450, %v520, 0.0
    %v539 = vsel %vm451, %v524, 0.0
    %v540 = vsel %vm452, %v528, 0.0
    %v541 = vsel %vm453, %v532, 0.0
    %542 = vmatprep.subr.mxu0 0.0
    %543 = vmatpush1.msra.mxu0 %v494
    %544 = vmatprep.subr.mxu0 0.0
    %545 = vmatpush1.msra.mxu0 %v495
    %546 = vmatprep.subr.mxu0 0.0
    %547 = vmatpush1.msra.mxu0 %v496
    %548 = vmatprep.subr.mxu0 0.0
    %549 = vmatpush1.msra.mxu0 %v497
    %550 = vmatprep.subr.mxu0 0.0
    %551 = vmatpush1.msra.mxu0 %v498
    %552 = vmatprep.subr.mxu0 0.0
    %553 = vmatpush1.msra.mxu0 %v499
    %554 = vmatprep.subr.mxu0 0.0
    %555 = vmatpush1.msra.mxu0 %v500
    %556 = vmatprep.subr.mxu0 0.0
    %557 = vmatpush1.msra.mxu0 %v501
    %558 = vmatprep.subr.mxu0 0.0
    %559 = vmatpush1.msra.mxu0 %v534
    %560 = vmatprep.subr.mxu0 0.0
    %561 = vmatpush1.msra.mxu0 %v535
    %562 = vmatprep.subr.mxu0 0.0
    %563 = vmatpush1.msra.mxu0 %v536
    %564 = vmatprep.subr.mxu0 0.0
    %565 = vmatpush1.msra.mxu0 %v537
    %566 = vmatprep.subr.mxu0 0.0
    %567 = vmatpush1.msra.mxu0 %v538
    %568 = vmatprep.subr.mxu0 0.0
    %569 = vmatpush1.msra.mxu0 %v539
    %570 = vmatprep.subr.mxu0 0.0
    %571 = vmatpush1.msra.mxu0 %v540
    %572 = vmatprep.subr.mxu0 0.0
    %573 = vmatpush1.msra.mxu0 %v541
    %574 = vmatprep.subr.mxu0 0.0
    %575 = vmatpush1.msra.mxu0 0.0
    %576 = vmatprep.subr.mxu0 0.0
    %577 = vmatpush1.msra.mxu0 0.0
    %578 = vmatprep.subr.mxu0 0.0
    %579 = vmatpush1.msra.mxu0 0.0
    %580 = vmatprep.subr.mxu0 0.0
    %581 = vmatpush1.msra.mxu0 0.0
    %582 = vmatprep.subr.mxu0 0.0
    %583 = vmatpush1.msra.mxu0 0.0
    %584 = vmatprep.subr.mxu0 0.0
    %585 = vmatpush1.msra.mxu0 0.0
    %586 = vmatprep.subr.mxu0 0.0
    %587 = vmatpush1.msra.mxu0 0.0
    %588 = vmatprep.subr.mxu0 0.0
    %589 = vmatpush1.msra.mxu0 0.0
    %590 = vmatprep.subr.mxu0 0.0
    %591 = vmatpush1.msra.mxu0 0.0
    %592 = vmatprep.subr.mxu0 0.0
    %593 = vmatpush1.msra.mxu0 0.0
    %594 = vmatprep.subr.mxu0 0.0
    %595 = vmatpush1.msra.mxu0 0.0
    %596 = vmatprep.subr.mxu0 0.0
    %597 = vmatpush1.msra.mxu0 0.0
    %598 = vmatprep.subr.mxu0 0.0
    %599 = vmatpush1.msra.mxu0 0.0
    %600 = vmatprep.subr.mxu0 0.0
    %601 = vmatpush1.msra.mxu0 0.0
    %602 = vmatprep.subr.mxu0 0.0
    %603 = vmatpush1.msra.mxu0 0.0
    %604 = vmatprep.subr.mxu0 0.0
    %605 = vmatpush1.msra.mxu0 0.0
    %606 = vmatprep.mubr.f32.mxu0 0.0
    %607 = vmatmul.mubr.f32.gmra.mrb[0].mxu0 %v49
    %v608 = vpop.f32.mrb[0].mxu0
    %v609 = vadd.f32 0.0, %v608
    %v610 = vpop.f32.mrb[0].mxu0
    %611 = vmatprep.mubr.f32.mxu0 0.0
    %612 = vmatmul.mubr.f32.gmra.mrb[0].mxu0 %v50
    %v613 = vpop.f32.mrb[0].mxu0
    %v614 = vadd.f32 0.0, %v613
    %v615 = vpop.f32.mrb[0].mxu0
    %616 = vmatprep.mubr.f32.mxu0 0.0
    %617 = vmatmul.mubr.f32.gmra.mrb[0].mxu0 %v51
    %v618 = vpop.f32.mrb[0].mxu0
    %v619 = vadd.f32 0.0, %v618
    %v620 = vpop.f32.mrb[0].mxu0
    %621 = vmatprep.mubr.f32.mxu0 0.0
    %622 = vmatmul.mubr.f32.gmra.mrb[0].mxu0 %v52
    %v623 = vpop.f32.mrb[0].mxu0
    %v624 = vadd.f32 0.0, %v623
    %v625 = vpop.f32.mrb[0].mxu0
    %626 = vmatprep.mubr.f32.mxu0 0.0
    %627 = vmatmul.mubr.f32.gmra.mrb[0].mxu0 %v53
    %v628 = vpop.f32.mrb[0].mxu0
    %v629 = vadd.f32 0.0, %v628
    %v630 = vpop.f32.mrb[0].mxu0
    %631 = vmatprep.mubr.f32.mxu0 0.0
    %632 = vmatmul.mubr.f32.gmra.mrb[0].mxu0 %v54
    %v633 = vpop.f32.mrb[0].mxu0
    %v634 = vadd.f32 0.0, %v633
    %v635 = vpop.f32.mrb[0].mxu0
    %636 = vmatprep.mubr.f32.mxu0 0.0
    %637 = vmatmul.mubr.f32.gmra.mrb[0].mxu0 %v55
    %v638 = vpop.f32.mrb[0].mxu0
    %v639 = vadd.f32 0.0, %v638
    %v640 = vpop.f32.mrb[0].mxu0
    %641 = vmatprep.mubr.f32.mxu0 0.0
    %642 = vmatmul.mubr.f32.gmra.mrb[0].mxu0 %v56
    %v643 = vpop.f32.mrb[0].mxu0
    %v644 = vadd.f32 0.0, %v643
    %v645 = vpop.f32.mrb[0].mxu0
    %646 = vmatprep.mubr.f32.mxu0 0.0
    %647 = vmatmul.mubr.f32.gmra.mrb[0].mxu0 %v57
    %v648 = vpop.f32.mrb[0].mxu0
    %v649 = vadd.f32 0.0, %v648
    %v650 = vpop.f32.mrb[0].mxu0
    %651 = vmatprep.mubr.f32.mxu0 0.0
    %652 = vmatmul.mubr.f32.gmra.mrb[0].mxu0 %v58
    %v653 = vpop.f32.mrb[0].mxu0
    %v654 = vadd.f32 0.0, %v653
    %v655 = vpop.f32.mrb[0].mxu0
    %656 = vmatprep.mubr.f32.mxu0 0.0
    %657 = vmatmul.mubr.f32.gmra.mrb[0].mxu0 %v59
    %v658 = vpop.f32.mrb[0].mxu0
    %v659 = vadd.f32 0.0, %v658
    %v660 = vpop.f32.mrb[0].mxu0
    %661 = vmatprep.mubr.f32.mxu0 0.0
    %662 = vmatmul.mubr.f32.gmra.mrb[0].mxu0 %v60
    %v663 = vpop.f32.mrb[0].mxu0
    %v664 = vadd.f32 0.0, %v663
    %v665 = vpop.f32.mrb[0].mxu0
    %666 = vmatprep.mubr.f32.mxu0 0.0
    %667 = vmatmul.mubr.f32.gmra.mrb[0].mxu0 %v61
    %v668 = vpop.f32.mrb[0].mxu0
    %v669 = vadd.f32 0.0, %v668
    %v670 = vpop.f32.mrb[0].mxu0
    %671 = vmatprep.mubr.f32.mxu0 0.0
    %672 = vmatmul.mubr.f32.gmra.mrb[0].mxu0 %v62
    %v673 = vpop.f32.mrb[0].mxu0
    %v674 = vadd.f32 0.0, %v673
    %v675 = vpop.f32.mrb[0].mxu0
    %676 = vmatprep.mubr.f32.mxu0 0.0
    %677 = vmatmul.mubr.f32.gmra.mrb[0].mxu0 %v63
    %v678 = vpop.f32.mrb[0].mxu0
    %v679 = vadd.f32 0.0, %v678
    %v680 = vpop.f32.mrb[0].mxu0
    %681 = vmatprep.mubr.f32.mxu0 0.0
    %682 = vmatmul.mubr.f32.gmra.mrb[0].mxu0 %v64
    %v683 = vpop.f32.mrb[0].mxu0
    %v684 = vadd.f32 0.0, %v683
    %v685 = vpop.f32.mrb[0].mxu0
    %686 = vmatprep.mubr.f32.mxu0 0.0
    %687 = vmatmul.mubr.f32.gmra.mrb[0].mxu0 %v65
    %v688 = vpop.f32.mrb[0].mxu0
    %v689 = vadd.f32 0.0, %v688
    %v690 = vpop.f32.mrb[0].mxu0
    %691 = vdwg.mxu0
    %692 = vset.pattern.permute.xlu0 6
    %693 = vperm.xlu0 %692, %v25
    %v694 = vpop.permute.xlu0 %693
    %696 = vset.pattern.permute.xlu0 6
    %697 = vperm.xlu0 %696, %v26
    %v698 = vpop.permute.xlu0 %697
    %700 = vset.pattern.permute.xlu0 6
    %701 = vperm.xlu0 %700, %v27
    %v702 = vpop.permute.xlu0 %701
    %704 = vset.pattern.permute.xlu0 6
    %705 = vperm.xlu0 %704, %v28
    %v706 = vpop.permute.xlu0 %705
    %708 = vset.pattern.permute.xlu0 6
    %709 = vperm.xlu0 %708, %v29
    %v710 = vpop.permute.xlu0 %709
    %712 = vset.pattern.permute.xlu0 6
    %713 = vperm.xlu0 %712, %v30
    %v714 = vpop.permute.xlu0 %713
    %716 = vset.pattern.permute.xlu0 6
    %717 = vperm.xlu0 %716, %v31
    %v718 = vpop.permute.xlu0 %717
    %720 = vset.pattern.permute.xlu0 6
    %721 = vperm.xlu0 %720, %v32
    %v722 = vpop.permute.xlu0 %721
    %vm724 = vcmp.gt.f32.partialorder %v609, %v694
    %vm725 = vcmp.gt.f32.partialorder %v614, %v698
    %vm726 = vcmp.gt.f32.partialorder %v619, %v702
    %vm727 = vcmp.gt.f32.partialorder %v624, %v706
    %vm728 = vcmp.gt.f32.partialorder %v629, %v710
    %vm729 = vcmp.gt.f32.partialorder %v634, %v714
    %vm730 = vcmp.gt.f32.partialorder %v639, %v718
    %vm731 = vcmp.gt.f32.partialorder %v644, %v722
    %v732 = vsel %vm724, %v649, 0.0
    %v733 = vsel %vm725, %v654, 0.0
    %v734 = vsel %vm726, %v659, 0.0
    %v735 = vsel %vm727, %v664, 0.0
    %v736 = vsel %vm728, %v669, 0.0
    %v737 = vsel %vm729, %v674, 0.0
    %v738 = vsel %vm730, %v679, 0.0
    %v739 = vsel %vm731, %v684, 0.0
    %740 = vset.pattern.permute.xlu0 7
    %741 = vperm.xlu0 %740, %v25
    %v742 = vpop.permute.xlu0 %741
    %v744 = vadd.f32 %v689, %v742
    %v746 = vsel %vm220, %v66, 0
    %748 = vmatprep.subr.mxu0 0.0
    %749 = vmatpush1.msra.mxu0 %v732
    %750 = vmatprep.subr.mxu0 0.0
    %751 = vmatpush1.msra.mxu0 %v733
    %752 = vmatprep.subr.mxu0 0.0
    %753 = vmatpush1.msra.mxu0 %v734
    %754 = vmatprep.subr.mxu0 0.0
    %755 = vmatpush1.msra.mxu0 %v735
    %756 = vmatprep.subr.mxu0 0.0
    %757 = vmatpush1.msra.mxu0 %v736
    %758 = vmatprep.subr.mxu0 0.0
    %759 = vmatpush1.msra.mxu0 %v737
    %760 = vmatprep.subr.mxu0 0.0
    %761 = vmatpush1.msra.mxu0 %v738
    %762 = vmatprep.subr.mxu0 0.0
    %763 = vmatpush1.msra.mxu0 %v739
    %764 = vmatprep.subr.mxu0 0.0
    %765 = vmatpush1.msra.mxu0 0.0
    %766 = vmatprep.subr.mxu0 0.0
    %767 = vmatpush1.msra.mxu0 0.0
    %768 = vmatprep.subr.mxu0 0.0
    %769 = vmatpush1.msra.mxu0 0.0
    %770 = vmatprep.subr.mxu0 0.0
    %771 = vmatpush1.msra.mxu0 0.0
    %772 = vmatprep.subr.mxu0 0.0
    %773 = vmatpush1.msra.mxu0 0.0
    %774 = vmatprep.subr.mxu0 0.0
    %775 = vmatpush1.msra.mxu0 0.0
    %776 = vmatprep.subr.mxu0 0.0
    %777 = vmatpush1.msra.mxu0 0.0
    %778 = vmatprep.subr.mxu0 0.0
    %779 = vmatpush1.msra.mxu0 0.0
    %780 = vmatprep.subr.mxu0 0.0
    %781 = vmatpush1.msra.mxu0 0.0
    %782 = vmatprep.subr.mxu0 0.0
    %783 = vmatpush1.msra.mxu0 0.0
    %784 = vmatprep.subr.mxu0 0.0
    %785 = vmatpush1.msra.mxu0 0.0
    %786 = vmatprep.subr.mxu0 0.0
    %787 = vmatpush1.msra.mxu0 0.0
    %788 = vmatprep.subr.mxu0 0.0
    %789 = vmatpush1.msra.mxu0 0.0
    %790 = vmatprep.subr.mxu0 0.0
    %791 = vmatpush1.msra.mxu0 0.0
    %792 = vmatprep.subr.mxu0 0.0
    %793 = vmatpush1.msra.mxu0 0.0
    %794 = vmatprep.subr.mxu0 0.0
    %795 = vmatpush1.msra.mxu0 0.0
    %796 = vmatprep.subr.mxu0 0.0
    %797 = vmatpush1.msra.mxu0 0.0
    %798 = vmatprep.subr.mxu0 0.0
    %799 = vmatpush1.msra.mxu0 0.0
    %800 = vmatprep.subr.mxu0 0.0
    %801 = vmatpush1.msra.mxu0 0.0
    %802 = vmatprep.subr.mxu0 0.0
    %803 = vmatpush1.msra.mxu0 0.0
    %804 = vmatprep.subr.mxu0 0.0
    %805 = vmatpush1.msra.mxu0 0.0
    %806 = vmatprep.subr.mxu0 0.0
    %807 = vmatpush1.msra.mxu0 0.0
    %808 = vmatprep.subr.mxu0 0.0
    %809 = vmatpush1.msra.mxu0 0.0
    %810 = vmatprep.subr.mxu0 0.0
    %811 = vmatpush1.msra.mxu0 0.0
    %812 = vmatprep.mubr.f32.mxu0 0.0
    %813 = vmatmul.mubr.f32.gmra.mrb[0].mxu0 %v746
    %v814 = vpop.f32.mrb[0].mxu0
    %v815 = vadd.f32 0.0, %v814
    %v816 = vpop.f32.mrb[0].mxu0
    %817 = vdwg.mxu0
    %v818 = vmul.f32 %v744, 1.442695
    %v819 = vpow.pop %v818
    %v821 = vrot.slane %v24, 1
    %v823 = vmul.f32 %v819, %v821
    %v824 = vadd.f32 %v823, %v744
    %v825 = vadd.f32 %v823, 1.0
    %v826 = vmul.f32 %v815, %v825
    %v827 = vrot.slane %v24, 4
    %v829 = vmul.f32 %v819, %v827
    %v830 = vadd.f32 %v829, 1.0
    %v831 = vmul.f32 %v815, %v830
    %v832 = vmul.f32 %v24, %v24
    %v833 = vmul.f32 %v824, %v824
    %v834 = vmul.f32 %v24, %v824
    %v835 = vmul.f32 %v832, %v24
    %v836 = vmul.f32 %v24, %v833
    %v837 = vmul.f32 %v832, %v824
    %839 = vset.pattern.permute.xlu0 0
    %840 = vperm.xlu0 %839, %v67
    %v841 = vpop.permute.xlu0 %840
    %v843 = vmul.f32 %v841, %v111
    %844 = vset.pattern.permute.xlu0 1
    %845 = vperm.xlu0 %844, %v67
    %v846 = vpop.permute.xlu0 %845
    %v848 = vlaneseq
    %v849 = vshrl.u32 %v848, 7
    %v850 = vsub.s32 0, %v849
    %v851 = vrot.slane %v824, %v850
    %v852 = vmul.f32 %v846, %v851
    %v853 = vadd.f32 %v843, %v852
    %854 = vset.pattern.permute.xlu0 2
    %855 = vperm.xlu0 %854, %v67
    %v856 = vpop.permute.xlu0 %855
    %v858 = vlaneseq
    %v859 = vshrl.u32 %v858, 7
    %v860 = vsub.s32 0, %v859
    %v861 = vrot.slane %v832, %v860
    %v862 = vmul.f32 %v856, %v861
    %v863 = vadd.f32 %v853, %v862
    %864 = vset.pattern.permute.xlu0 3
    %865 = vperm.xlu0 %864, %v67
    %v866 = vpop.permute.xlu0 %865
    %v868 = vlaneseq
    %v869 = vshrl.u32 %v868, 7
    %v870 = vsub.s32 0, %v869
    %v871 = vrot.slane %v833, %v870
    %v872 = vmul.f32 %v866, %v871
    %v873 = vadd.f32 %v863, %v872
    %874 = vset.pattern.permute.xlu0 4
    %875 = vperm.xlu0 %874, %v67
    %v876 = vpop.permute.xlu0 %875
    %v878 = vlaneseq
    %v879 = vshrl.u32 %v878, 7
    %v880 = vsub.s32 0, %v879
    %v881 = vrot.slane %v834, %v880
    %v882 = vmul.f32 %v876, %v881
    %v883 = vadd.f32 %v873, %v882
    %884 = vset.pattern.permute.xlu0 5
    %885 = vperm.xlu0 %884, %v67
    %v886 = vpop.permute.xlu0 %885
    %v888 = vlaneseq
    %v889 = vshrl.u32 %v888, 7
    %v890 = vsub.s32 0, %v889
    %v891 = vrot.slane %v835, %v890
    %v892 = vmul.f32 %v886, %v891
    %v893 = vadd.f32 %v883, %v892
    %894 = vset.pattern.permute.xlu0 6
    %895 = vperm.xlu0 %894, %v67
    %v896 = vpop.permute.xlu0 %895
    %v898 = vlaneseq
    %v899 = vshrl.u32 %v898, 7
    %v900 = vsub.s32 0, %v899
    %v901 = vrot.slane %v836, %v900
    %v902 = vmul.f32 %v896, %v901
    %v903 = vadd.f32 %v893, %v902
    %904 = vset.pattern.permute.xlu0 7
    %905 = vperm.xlu0 %904, %v67
    %v906 = vpop.permute.xlu0 %905
    %v908 = vlaneseq
    %v909 = vshrl.u32 %v908, 7
    %v910 = vsub.s32 0, %v909
    %v911 = vrot.slane %v837, %v910
    %v912 = vmul.f32 %v906, %v911
    %v913 = vadd.f32 %v903, %v912
    %914 = vst [vmem:[#allocation2] sm:$0x1] %v24
    %915 = vst [vmem:[#allocation2 + $0x1] sm:$0x1] %v824
    %916 = vst [vmem:[#allocation2] sm:$0x4] %v24
    %v917 = vrot.slane %v24, 2
    %v919 = vmul.f32 %v826, %v917
    %v920 = vrot.slane %v24, 3
    %v922 = vmul.f32 %v819, %v920
    %v923 = vadd.f32 %v919, %v922
    %924 = vst [vmem:[#allocation2 + $0x3] sm:$0x1] %v923
    %925 = vst [vmem:[#allocation2 + $0x4] sm:$0x1] 1.0
    %v926 = vmul.f32 %v831, %v831
    %v927 = vmul.f32 %v819, %v819
    %v928 = vadd.f32 %v926, %v927
    %v929 = vrsqrt.pop %v928
    %v930 = vmul.f32 %v928, %v929
    %vm931 = vcmp.eq.f32.partialorder %v928, inf
    %v932 = vsel %vm931, %v928, %v930
    %vm933 = vcmp.eq.f32.partialorder %v928, 0.0
    %v934 = vand.u32 %v928, 2147483648
    %v935 = vsel %vm933, %v934, %v932
    %936 = vst [vmem:[#allocation2 + $0x4] sm:$0x2] %v935
    %v937 = vsub.f32 %v913, %v24
    %938 = vst [vmem:[#allocation2 + $0x6] sm:$0xf] %v937
    // Predicated region
    $region26: #{tpu_custom_call.1} parent=1 // pred_check
      _
    $region27: #{tpu_custom_call.1} parent=1 // pred_check_branch
      %940 = sbr.rel (0) target = $region29
    $region28: #{tpu_custom_call.1} parent=1 // pred_region
      %s942 = ssub.s32 256, 256
      %943 = vsyncadd [#allocation3], %s942
      %s944 = sshll.u32 [#allocation2], 4
      %s945 = int_to_ptr.vmem [resolvable:$true] %s944
      %950 = dma.vmem_to_hbm [thread:$0]  %s945, 256, %s6, [#allocation3], 128, 128, 8
    $region29: #{tpu_custom_call.1} parent=1 // pred_fallthru
      _
    // Predicated region
    $region30: #{tpu_custom_call.1} parent=1 // pred_check
      _
    $region31: #{tpu_custom_call.1} parent=1 // pred_check_branch
      %952 = sbr.rel (0) target = $region33
    $region32: #{tpu_custom_call.1} parent=1 // pred_region
      %953 = dma.done [#allocation3], 256
    $region33: #{tpu_custom_call.1} parent=1 // pred_fallthru
      _
    %954 = vsyncpa [#allocation3], 1

</llo_original>
